<compile_context>
chip_gen: v7x
topology: tpu7x:2x2x1
jax: 0.10.0
libtpu: 0.0.40
codegen_flags: <defaults>
</compile_context>

<pallas_src>
import functools

import jax
import jax.numpy as jnp
from jax.experimental import pallas as pl
from jax.experimental.pallas import tpu as pltpu

LANES = 128                       # vreg lane width (fast axis)
SLAB_ROWS = 512                   # in-kernel compute slab (512x128 f32 = 256 KiB)
_MAX_BLOCK_BYTES = 8 * 1024 * 1024   # per-input per-grid-step block target
_MIN_PALLAS_ELEMENTS = 1 << 20       # below this, pure-JAX fast path
_VMEM_MARGIN_BYTES = 8 * 1024 * 1024


def _sublane(dtype) -> int:
    """Native sublane granularity for a dtype (8 f32 / 16 bf16 / 32 int8-fp8)."""
    return max(8, 32 // jnp.dtype(dtype).itemsize)


def _num_parallel_cores() -> int:
    """2 on chips that split a 'parallel' grid axis across TensorCores."""
    try:
        kind = jax.devices()[0].device_kind.lower()
    except Exception:
        return 1
    if any(tag in kind for tag in ("v4", "v5p", "v7", "7x")):
        return 2
    return 1


def _mse_ref(output, target):
    d = output.astype(jnp.float32) - target.astype(jnp.float32)
    return jnp.mean(d * d)


def _mse_partial_kernel(o_ref, t_ref, out_ref, acc_ref, *,
                        step_axis, single_step, slab_rows):
    """Accumulate sum((o - t)^2) over this core's row tiles into out_ref[0, 0]."""
    row_tile = o_ref.shape[0]
    nfull = row_tile // slab_rows
    rem = row_tile - nfull * slab_rows

    def init():
        acc_ref[...] = jnp.zeros_like(acc_ref)

    def accumulate():
        # Stream the block through small slabs: bounded VMEM temporaries and a
        # fixed-size accumulator regardless of how large the input block is.
        if nfull > 0:
            @pl.loop(0, nfull)
            def _(j):
                off = pl.multiple_of(j * slab_rows, slab_rows)
                o = o_ref[pl.ds(off, slab_rows), :].astype(jnp.float32)
                t = t_ref[pl.ds(off, slab_rows), :].astype(jnp.float32)
                d = o - t
                acc_ref[...] += d * d
        if rem > 0:  # static remainder (multiple of the dtype sublane granule)
            base = nfull * slab_rows
            o = o_ref[pl.ds(base, rem), :].astype(jnp.float32)
            t = t_ref[pl.ds(base, rem), :].astype(jnp.float32)
            d = o - t
            acc_ref[pl.ds(0, rem), :] += d * d

    def finalize():
        # Single small cross-lane (XLU) reduce per core.
        out_ref[0, 0] = jnp.sum(acc_ref[...])

    if single_step:
        init()
        accumulate()
        finalize()
    else:
        i = pl.program_id(step_axis)

        @pl.when(i == 0)
        def _():
            init()

        accumulate()

        @pl.when(i == pl.num_programs(step_axis) - 1)
        def _():
            finalize()


def reconstruction_loss(output, target, *,
                        min_pallas_elements=_MIN_PALLAS_ELEMENTS,
                        max_block_bytes=_MAX_BLOCK_BYTES,
                        num_cores=None):
    """Pallas equivalent of ReconstructionLoss()(output, target) == F.mse_loss."""
    # TODO(synk): F.mse_loss broadcasts mismatched shapes (with a warning); we
    # require identical shapes, which is the only case the original module uses.
    assert output.shape == target.shape, "output/target shape mismatch"
    n = output.size
    if n == 0:
        return jnp.float32(jnp.nan)   # matches torch's mean over zero elements

    # Fast path: small tensors (launch/pipeline-prime cost dominates) or tensors
    # whose element count is not a multiple of 128 (a prefix slice would force a
    # near-full HBM copy of both inputs). XLA's fused reduction is one HBM pass.
    if n < min_pallas_elements or n % LANES != 0:
        return _mse_ref(output, target)

    rows = n // LANES
    sub = max(_sublane(output.dtype), _sublane(target.dtype))
    usable = (rows // sub) * sub
    if usable < sub:
        return _mse_ref(output, target)

    o2d = output.reshape(rows, LANES)   # free full-extent reshape (bitcast)
    t2d = target.reshape(rows, LANES)
    o_item = jnp.dtype(output.dtype).itemsize
    t_item = jnp.dtype(target.dtype).itemsize

    if num_cores is None:
        num_cores = _num_parallel_cores()
    num_cores = max(1, int(num_cores))
    if usable < num_cores * sub:
        num_cores = 1

    # Per-step block rows: as large as the VMEM budget allows (amortizes the
    # ~0.35 us per-grid-step overhead), rounded to the dtype sublane granule.
    cap_rows = max(sub, (max_block_bytes // (LANES * max(o_item, t_item)) // sub) * sub)
    tiles_per_core = pl.cdiv(usable, num_cores * cap_rows)
    row_tile = (usable // (num_cores * tiles_per_core) // sub) * sub
    if row_tile < sub:               # degenerate split: fall back to one core
        num_cores = 1
        tiles_per_core = pl.cdiv(usable, cap_rows)
        row_tile = (usable // tiles_per_core // sub) * sub
        if row_tile < sub:
            tiles_per_core = 1
            row_tile = usable
    covered = num_cores * tiles_per_core * row_tile
    n_main = covered * LANES

    if num_cores > 1:
        grid = (num_cores, tiles_per_core)
        step_axis = 1
        tpc = tiles_per_core
        in_map = lambda c, i: (c * tpc + i, 0)
        out_map = lambda c, i: (c, 0)
        dim_sem = ("parallel", "arbitrary")
    else:
        grid = (tiles_per_core,)
        step_axis = 0
        in_map = lambda i: (i, 0)
        out_map = lambda i: (0, 0)
        dim_sem = ("arbitrary",)

    # Footprint: 2 pipeline buffers x (both input blocks) + acc + slab temps.
    block_bytes = row_tile * LANES * (o_item + t_item)
    acc_and_temps = 4 * SLAB_ROWS * LANES * 4
    vmem_limit = int(min(96 << 20,
                         max(32 << 20,
                             2 * block_bytes + acc_and_temps + _VMEM_MARGIN_BYTES)))

    kernel = functools.partial(_mse_partial_kernel,
                               step_axis=step_axis,
                               single_step=(tiles_per_core == 1),
                               slab_rows=SLAB_ROWS)

    partials = pl.pallas_call(
        kernel,
        out_shape=jax.ShapeDtypeStruct((num_cores, 1), jnp.float32),
        grid_spec=pltpu.PrefetchScalarGridSpec(
            num_scalar_prefetch=0,
            grid=grid,
            in_specs=[
                pl.BlockSpec((row_tile, LANES), in_map),
                pl.BlockSpec((row_tile, LANES), in_map),
            ],
            out_specs=pl.BlockSpec((1, 1), out_map, memory_space=pltpu.SMEM),
            scratch_shapes=[pltpu.VMEM((SLAB_ROWS, LANES), jnp.float32)],
        ),
        compiler_params=pltpu.CompilerParams(
            dimension_semantics=dim_sem,
            vmem_limit_bytes=vmem_limit),
        cost_estimate=pl.CostEstimate(
            flops=3 * n_main,
            transcendentals=0,
            bytes_accessed=n_main * (o_item + t_item) + 4 * num_cores),
    )(o2d, t2d)

    sq_sum = jnp.sum(partials)

    # Tiny row tail not covered by the aligned grid (reads only the tail bytes).
    if covered < rows:
        d_tail = (o2d[covered:].astype(jnp.float32)
                  - t2d[covered:].astype(jnp.float32))
        sq_sum = sq_sum + jnp.sum(d_tail * d_tail)

    return (sq_sum / jnp.float32(n)).astype(jnp.float32)


if __name__ == "__main__":
    key = jax.random.PRNGKey(0)
    k_out, k_tgt = jax.random.split(key)
    # Small NCHW-like shapes consistent with a reconstruction output/target pair.
    output = jax.random.normal(k_out, (2, 4, 16, 16), dtype=jnp.float32)
    target = jax.random.normal(k_tgt, (2, 4, 16, 16), dtype=jnp.float32)
    ref = jnp.mean((output - target) ** 2)

    # 1) Default path: small input -> fused-XLA fast path.
    loss = reconstruction_loss(output, target)
    jax.block_until_ready(loss)
    assert jnp.allclose(loss, ref, rtol=1e-5, atol=1e-6), (loss, ref)

    # 2) Force the Pallas kernel (single-step-per-core path).
    loss_k = reconstruction_loss(output, target, min_pallas_elements=0)
    jax.block_until_ready(loss_k)
    assert jnp.allclose(loss_k, ref, rtol=1e-5, atol=1e-6), (loss_k, ref)

    # 3) Force the multi-step accumulation path (tiny blocks, one core).
    loss_m = reconstruction_loss(output, target, min_pallas_elements=0,
                                 max_block_bytes=4096, num_cores=1)
    jax.block_until_ready(loss_m)
    assert jnp.allclose(loss_m, ref, rtol=1e-5, atol=1e-6), (loss_m, ref)

    print("KERNEL_OK")
</pallas_src>

<mosaic_0001>
module attributes {stable_mosaic.version = 11 : i64} {
  func.func @_mse_partial_kernel(%arg0: i32, %arg1: memref<16x128xf32, #tpu.memory_space<vmem>>, %arg2: memref<16x128xf32, #tpu.memory_space<vmem>>, %arg3: memref<1x1xf32, #tpu.memory_space<smem>>, %arg4: memref<512x128xf32, #tpu.memory_space<vmem>>) attributes {dimension_semantics = [#tpu.dimension_semantics<arbitrary>], iteration_bounds = array<i64: 1>, scalar_prefetch = 0 : i64, scratch_operands = 1 : i64, tpu.core_type = #tpu.core_type<tc>, window_params = [{transform_indices = @transform_0, window_bounds = array<i64: 16, 128>}, {transform_indices = @transform_1, window_bounds = array<i64: 16, 128>}, {transform_indices = @transform_2, window_bounds = array<i64: 1, 1>}]} {
    %cst = arith.constant 0.000000e+00 : f32
    %0 = vector.broadcast %cst : f32 to vector<512x128xf32>
    %c0 = arith.constant 0 : index
    %c0_0 = arith.constant 0 : index
    %1 = vector.load %arg4[%c0, %c0_0] : memref<512x128xf32, #tpu.memory_space<vmem>>, vector<512x128xf32>
    tpu.vector_store %arg4[%c0, %c0_0], %0 {strides = array<i32>} : memref<512x128xf32, #tpu.memory_space<vmem>>, vector<512x128xf32>,
    %c0_1 = arith.constant 0 : index
    %c0_2 = arith.constant 0 : index
    %2 = vector.load %arg1[%c0_1, %c0_2] : memref<16x128xf32, #tpu.memory_space<vmem>>, vector<16x128xf32>
    %c0_3 = arith.constant 0 : index
    %c0_4 = arith.constant 0 : index
    %3 = vector.load %arg2[%c0_3, %c0_4] : memref<16x128xf32, #tpu.memory_space<vmem>>, vector<16x128xf32>
    %4 = arith.subf %2, %3 : vector<16x128xf32>
    %c0_5 = arith.constant 0 : index
    %c0_6 = arith.constant 0 : index
    %5 = vector.load %arg4[%c0_5, %c0_6] : memref<512x128xf32, #tpu.memory_space<vmem>>, vector<16x128xf32>
    %6 = arith.mulf %4, %4 : vector<16x128xf32>
    %7 = arith.addf %5, %6 : vector<16x128xf32>
    %c0_7 = arith.constant 0 : index
    %c0_8 = arith.constant 0 : index
    %8 = vector.load %arg4[%c0_7, %c0_8] : memref<512x128xf32, #tpu.memory_space<vmem>>, vector<16x128xf32>
    tpu.vector_store %arg4[%c0_7, %c0_8], %7 {strides = array<i32>} : memref<512x128xf32, #tpu.memory_space<vmem>>, vector<16x128xf32>,
    %c0_9 = arith.constant 0 : index
    %c0_10 = arith.constant 0 : index
    %9 = vector.load %arg4[%c0_9, %c0_10] : memref<512x128xf32, #tpu.memory_space<vmem>>, vector<512x128xf32>
    %10 = vector.shape_cast %9 : vector<512x128xf32> to vector<1x512x128xf32>
    %cst_11 = arith.constant dense<0.000000e+00> : vector<1xf32>
    %11 = vector.multi_reduction <add>, %10, %cst_11 [1, 2] : vector<1x512x128xf32> to vector<1xf32>
    %12 = vector.shape_cast %11 : vector<1xf32> to vector<1x1x1xf32>
    %13 = vector.extract %12[0, 0, 0] : f32 from vector<1x1x1xf32>
    %c0_12 = arith.constant 0 : index
    %c0_13 = arith.constant 0 : index
    %14 = memref.load %arg3[%c0_12, %c0_13] : memref<1x1xf32, #tpu.memory_space<smem>>
    memref.store %13, %arg3[%c0_12, %c0_13] : memref<1x1xf32, #tpu.memory_space<smem>>
    return
  }
  func.func @transform_0(%arg0: i32) -> (i32, i32) {
    %c0_i32 = arith.constant 0 : i32
    %c0_i32_0 = arith.constant 0 : i32
    return %arg0, %c0_i32 : i32, i32
  }
  func.func @transform_1(%arg0: i32) -> (i32, i32) {
    %c0_i32 = arith.constant 0 : i32
    %c0_i32_0 = arith.constant 0 : i32
    return %arg0, %c0_i32 : i32, i32
  }
  func.func @transform_2(%arg0: i32) -> (i32, i32) {
    %c0_i32 = arith.constant 0 : i32
    %c0_i32_0 = arith.constant 0 : i32
    %c0_i32_1 = arith.constant 0 : i32
    return %c0_i32, %c0_i32_0 : i32, i32
  }
}

</mosaic_0001>

<llo_original>
// kernel: tpu_custom_call.1
$region0: #{tpu_custom_call.1}
  #allocation0 [shape = 'u32[]', space=smem, size = 0x4, offset = 0x4, fixed_abs, tag = 'smem constant byte address 0x4 - core index']
  #allocation1 [shape = 'u32[144,128]{1,0:T(1,128)}', space=vmem, size = 0x12000, scoped, tag = 'internal scratch']
  #allocation2 [shape = 'f32[512,128]{1,0:T(8,128)}', space=vmem, size = 0x40000, scoped, tag = 'scratch operand']
  %s0 = inlined_call_operand.hbm [shape: f32[16,128], index: 0, kind: input, shape index: {}]
  %s1 = inlined_call_operand.hbm [shape: f32[16,128], index: 1, kind: input, shape index: {}]
  %s2 = inlined_call_operand.hbm [shape: f32[1,1], index: 2, kind: output, shape index: {}]
  %s3 = sld [smem:[#allocation0]]
  $region26: #{tpu_custom_call.1} parent=0
    _
  %s5 = ssub.s32 1, %s3
  %s6 = scalar_select 0, %s5, %s3
  $region1: #{tpu_custom_call.1} parent=0
    #allocation3 [shape = 'u8[8192]{0}', space=vmem, size = 0x2000, scoped, tag = 'input window, operand 0, single buffered']
    #allocation4 [shape = 's32[1]{0}', space=sflag, size = 0x4, scoped, tag = 'scoped memory for tpu_custom_call.1']
    #allocation5 [shape = 's32[1]{0}', space=sflag, size = 0x4, scoped, tag = 'scoped memory for tpu_custom_call.1']
    #allocation6 [shape = 'u8[8192]{0}', space=vmem, size = 0x2000, scoped, tag = 'input window, operand 1, single buffered']
    #allocation7 [shape = 's32[1]{0}', space=sflag, size = 0x4, scoped, tag = 'scoped memory for tpu_custom_call.1']
    #allocation8 [shape = 'u8[512]{0}', space=smem, size = 0x200, scoped, tag = 'output window, operand 0, single buffered']
    %7 = vsyncpa [#allocation4], 0
    %8 = vsyncpa [#allocation7], 0
    %9 = vsyncpa [#allocation5], 0
    // Predicated region
    $region2: #{tpu_custom_call.1} parent=1 // pred_check
      _
    $region3: #{tpu_custom_call.1} parent=1 // pred_check_branch
      %11 = sbr.rel (0) target = $region5
    $region4: #{tpu_custom_call.1} parent=1 // pred_region
      %s13 = ssub.s32 256, 256
      %14 = vsyncadd [#allocation4], %s13
      %s15 = sshll.u32 [#allocation3], 4
      %s16 = int_to_ptr.vmem [resolvable:$true] %s15
      %21 = dma.hbm_to_vmem [thread:$0]  %s0, 256, %s16, [#allocation4], 128, 128, 8
    $region5: #{tpu_custom_call.1} parent=1 // pred_fallthru
      _
    // Predicated region
    $region6: #{tpu_custom_call.1} parent=1 // pred_check
      _
    $region7: #{tpu_custom_call.1} parent=1 // pred_check_branch
      %23 = sbr.rel (0) target = $region9
    $region8: #{tpu_custom_call.1} parent=1 // pred_region
      %s25 = ssub.s32 256, 256
      %26 = vsyncadd [#allocation7], %s25
      %s27 = sshll.u32 [#allocation6], 4
      %s28 = int_to_ptr.vmem [resolvable:$true] %s27
      %33 = dma.hbm_to_vmem [thread:$0]  %s1, 256, %s28, [#allocation7], 128, 128, 8
    $region9: #{tpu_custom_call.1} parent=1 // pred_fallthru
      _
    // Predicated region
    $region10: #{tpu_custom_call.1} parent=1 // pred_check
      _
    $region11: #{tpu_custom_call.1} parent=1 // pred_check_branch
      %35 = sbr.rel (0) target = $region13
    $region12: #{tpu_custom_call.1} parent=1 // pred_region
      %36 = dma.done [#allocation4], 256
    $region13: #{tpu_custom_call.1} parent=1 // pred_fallthru
      _
    // Predicated region
    $region14: #{tpu_custom_call.1} parent=1 // pred_check
      _
    $region15: #{tpu_custom_call.1} parent=1 // pred_check_branch
      %38 = sbr.rel (0) target = $region17
    $region16: #{tpu_custom_call.1} parent=1 // pred_region
      %39 = dma.done [#allocation7], 256
    $region17: #{tpu_custom_call.1} parent=1 // pred_fallthru
      _
    %40 = vst [vmem:[#allocation2] sm:$0xff] 0.0
    %41 = vst [vmem:[#allocation2 + $0x8] sm:$0xff] 0.0
    %42 = vst [vmem:[#allocation2 + $0x10] sm:$0xff] 0.0
    %43 = vst [vmem:[#allocation2 + $0x18] sm:$0xff] 0.0
    %44 = vst [vmem:[#allocation2 + $0x20] sm:$0xff] 0.0
    %45 = vst [vmem:[#allocation2 + $0x28] sm:$0xff] 0.0
    %46 = vst [vmem:[#allocation2 + $0x30] sm:$0xff] 0.0
    %47 = vst [vmem:[#allocation2 + $0x38] sm:$0xff] 0.0
    %48 = vst [vmem:[#allocation2 + $0x40] sm:$0xff] 0.0
    %49 = vst [vmem:[#allocation2 + $0x48] sm:$0xff] 0.0
    %50 = vst [vmem:[#allocation2 + $0x50] sm:$0xff] 0.0
    %51 = vst [vmem:[#allocation2 + $0x58] sm:$0xff] 0.0
    %52 = vst [vmem:[#allocation2 + $0x60] sm:$0xff] 0.0
    %53 = vst [vmem:[#allocation2 + $0x68] sm:$0xff] 0.0
    %54 = vst [vmem:[#allocation2 + $0x70] sm:$0xff] 0.0
    %55 = vst [vmem:[#allocation2 + $0x78] sm:$0xff] 0.0
    %56 = vst [vmem:[#allocation2 + $0x80] sm:$0xff] 0.0
    %57 = vst [vmem:[#allocation2 + $0x88] sm:$0xff] 0.0
    %58 = vst [vmem:[#allocation2 + $0x90] sm:$0xff] 0.0
    %59 = vst [vmem:[#allocation2 + $0x98] sm:$0xff] 0.0
    %60 = vst [vmem:[#allocation2 + $0xa0] sm:$0xff] 0.0
    %61 = vst [vmem:[#allocation2 + $0xa8] sm:$0xff] 0.0
    %62 = vst [vmem:[#allocation2 + $0xb0] sm:$0xff] 0.0
    %63 = vst [vmem:[#allocation2 + $0xb8] sm:$0xff] 0.0
    %64 = vst [vmem:[#allocation2 + $0xc0] sm:$0xff] 0.0
    %65 = vst [vmem:[#allocation2 + $0xc8] sm:$0xff] 0.0
    %66 = vst [vmem:[#allocation2 + $0xd0] sm:$0xff] 0.0
    %67 = vst [vmem:[#allocation2 + $0xd8] sm:$0xff] 0.0
    %68 = vst [vmem:[#allocation2 + $0xe0] sm:$0xff] 0.0
    %69 = vst [vmem:[#allocation2 + $0xe8] sm:$0xff] 0.0
    %70 = vst [vmem:[#allocation2 + $0xf0] sm:$0xff] 0.0
    %71 = vst [vmem:[#allocation2 + $0xf8] sm:$0xff] 0.0
    %72 = vst [vmem:[#allocation2 + $0x100] sm:$0xff] 0.0
    %73 = vst [vmem:[#allocation2 + $0x108] sm:$0xff] 0.0
    %74 = vst [vmem:[#allocation2 + $0x110] sm:$0xff] 0.0
    %75 = vst [vmem:[#allocation2 + $0x118] sm:$0xff] 0.0
    %76 = vst [vmem:[#allocation2 + $0x120] sm:$0xff] 0.0
    %77 = vst [vmem:[#allocation2 + $0x128] sm:$0xff] 0.0
    %78 = vst [vmem:[#allocation2 + $0x130] sm:$0xff] 0.0
    %79 = vst [vmem:[#allocation2 + $0x138] sm:$0xff] 0.0
    %80 = vst [vmem:[#allocation2 + $0x140] sm:$0xff] 0.0
    %81 = vst [vmem:[#allocation2 + $0x148] sm:$0xff] 0.0
    %82 = vst [vmem:[#allocation2 + $0x150] sm:$0xff] 0.0
    %83 = vst [vmem:[#allocation2 + $0x158] sm:$0xff] 0.0
    %84 = vst [vmem:[#allocation2 + $0x160] sm:$0xff] 0.0
    %85 = vst [vmem:[#allocation2 + $0x168] sm:$0xff] 0.0
    %86 = vst [vmem:[#allocation2 + $0x170] sm:$0xff] 0.0
    %87 = vst [vmem:[#allocation2 + $0x178] sm:$0xff] 0.0
    %88 = vst [vmem:[#allocation2 + $0x180] sm:$0xff] 0.0
    %89 = vst [vmem:[#allocation2 + $0x188] sm:$0xff] 0.0
    %90 = vst [vmem:[#allocation2 + $0x190] sm:$0xff] 0.0
    %91 = vst [vmem:[#allocation2 + $0x198] sm:$0xff] 0.0
    %92 = vst [vmem:[#allocation2 + $0x1a0] sm:$0xff] 0.0
    %93 = vst [vmem:[#allocation2 + $0x1a8] sm:$0xff] 0.0
    %94 = vst [vmem:[#allocation2 + $0x1b0] sm:$0xff] 0.0
    %95 = vst [vmem:[#allocation2 + $0x1b8] sm:$0xff] 0.0
    %96 = vst [vmem:[#allocation2 + $0x1c0] sm:$0xff] 0.0
    %97 = vst [vmem:[#allocation2 + $0x1c8] sm:$0xff] 0.0
    %98 = vst [vmem:[#allocation2 + $0x1d0] sm:$0xff] 0.0
    %99 = vst [vmem:[#allocation2 + $0x1d8] sm:$0xff] 0.0
    %100 = vst [vmem:[#allocation2 + $0x1e0] sm:$0xff] 0.0
    %101 = vst [vmem:[#allocation2 + $0x1e8] sm:$0xff] 0.0
    %102 = vst [vmem:[#allocation2 + $0x1f0] sm:$0xff] 0.0
    %103 = vst [vmem:[#allocation2 + $0x1f8] sm:$0xff] 0.0
    %v104 = vld [vmem:[#allocation3] sm:$0xff]
    %v105 = vld [vmem:[#allocation3 + $0x8] sm:$0xff]
    %v106 = vld [vmem:[#allocation6] sm:$0xff]
    %v107 = vld [vmem:[#allocation6 + $0x8] sm:$0xff]
    %v108 = vsub.f32 %v104, %v106
    %v109 = vsub.f32 %v105, %v107
    %v110 = vld [vmem:[#allocation2] sm:$0xff]
    %v111 = vld [vmem:[#allocation2 + $0x8] sm:$0xff]
    %v112 = vmul.f32 %v108, %v108
    %v113 = vmul.f32 %v109, %v109
    %v114 = vadd.f32 %v110, %v112
    %v115 = vadd.f32 %v111, %v113
    %116 = vst [vmem:[#allocation2] sm:$0xff] %v114
    %117 = vst [vmem:[#allocation2 + $0x8] sm:$0xff] %v115
    %v118 = vld [vmem:[#allocation2] sm:$0xff]
    %v119 = vld [vmem:[#allocation2 + $0x8] sm:$0xff]
    %v120 = vld [vmem:[#allocation2 + $0x10] sm:$0xff]
    %v121 = vld [vmem:[#allocation2 + $0x18] sm:$0xff]
    %v122 = vld [vmem:[#allocation2 + $0x20] sm:$0xff]
    %v123 = vld [vmem:[#allocation2 + $0x28] sm:$0xff]
    %v124 = vld [vmem:[#allocation2 + $0x30] sm:$0xff]
    %v125 = vld [vmem:[#allocation2 + $0x38] sm:$0xff]
    %v126 = vld [vmem:[#allocation2 + $0x40] sm:$0xff]
    %v127 = vld [vmem:[#allocation2 + $0x48] sm:$0xff]
    %v128 = vld [vmem:[#allocation2 + $0x50] sm:$0xff]
    %v129 = vld [vmem:[#allocation2 + $0x58] sm:$0xff]
    %v130 = vld [vmem:[#allocation2 + $0x60] sm:$0xff]
    %v131 = vld [vmem:[#allocation2 + $0x68] sm:$0xff]
    %v132 = vld [vmem:[#allocation2 + $0x70] sm:$0xff]
    %v133 = vld [vmem:[#allocation2 + $0x78] sm:$0xff]
    %v134 = vld [vmem:[#allocation2 + $0x80] sm:$0xff]
    %v135 = vld [vmem:[#allocation2 + $0x88] sm:$0xff]
    %v136 = vld [vmem:[#allocation2 + $0x90] sm:$0xff]
    %v137 = vld [vmem:[#allocation2 + $0x98] sm:$0xff]
    %v138 = vld [vmem:[#allocation2 + $0xa0] sm:$0xff]
    %v139 = vld [vmem:[#allocation2 + $0xa8] sm:$0xff]
    %v140 = vld [vmem:[#allocation2 + $0xb0] sm:$0xff]
    %v141 = vld [vmem:[#allocation2 + $0xb8] sm:$0xff]
    %v142 = vld [vmem:[#allocation2 + $0xc0] sm:$0xff]
    %v143 = vld [vmem:[#allocation2 + $0xc8] sm:$0xff]
    %v144 = vld [vmem:[#allocation2 + $0xd0] sm:$0xff]
    %v145 = vld [vmem:[#allocation2 + $0xd8] sm:$0xff]
    %v146 = vld [vmem:[#allocation2 + $0xe0] sm:$0xff]
    %v147 = vld [vmem:[#allocation2 + $0xe8] sm:$0xff]
    %v148 = vld [vmem:[#allocation2 + $0xf0] sm:$0xff]
    %v149 = vld [vmem:[#allocation2 + $0xf8] sm:$0xff]
    %v150 = vld [vmem:[#allocation2 + $0x100] sm:$0xff]
    %v151 = vld [vmem:[#allocation2 + $0x108] sm:$0xff]
    %v152 = vld [vmem:[#allocation2 + $0x110] sm:$0xff]
    %v153 = vld [vmem:[#allocation2 + $0x118] sm:$0xff]
    %v154 = vld [vmem:[#allocation2 + $0x120] sm:$0xff]
    %v155 = vld [vmem:[#allocation2 + $0x128] sm:$0xff]
    %v156 = vld [vmem:[#allocation2 + $0x130] sm:$0xff]
    %v157 = vld [vmem:[#allocation2 + $0x138] sm:$0xff]
    %v158 = vld [vmem:[#allocation2 + $0x140] sm:$0xff]
    %v159 = vld [vmem:[#allocation2 + $0x148] sm:$0xff]
    %v160 = vld [vmem:[#allocation2 + $0x150] sm:$0xff]
    %v161 = vld [vmem:[#allocation2 + $0x158] sm:$0xff]
    %v162 = vld [vmem:[#allocation2 + $0x160] sm:$0xff]
    %v163 = vld [vmem:[#allocation2 + $0x168] sm:$0xff]
    %v164 = vld [vmem:[#allocation2 + $0x170] sm:$0xff]
    %v165 = vld [vmem:[#allocation2 + $0x178] sm:$0xff]
    %v166 = vld [vmem:[#allocation2 + $0x180] sm:$0xff]
    %v167 = vld [vmem:[#allocation2 + $0x188] sm:$0xff]
    %v168 = vld [vmem:[#allocation2 + $0x190] sm:$0xff]
    %v169 = vld [vmem:[#allocation2 + $0x198] sm:$0xff]
    %v170 = vld [vmem:[#allocation2 + $0x1a0] sm:$0xff]
    %v171 = vld [vmem:[#allocation2 + $0x1a8] sm:$0xff]
    %v172 = vld [vmem:[#allocation2 + $0x1b0] sm:$0xff]
    %v173 = vld [vmem:[#allocation2 + $0x1b8] sm:$0xff]
    %v174 = vld [vmem:[#allocation2 + $0x1c0] sm:$0xff]
    %v175 = vld [vmem:[#allocation2 + $0x1c8] sm:$0xff]
    %v176 = vld [vmem:[#allocation2 + $0x1d0] sm:$0xff]
    %v177 = vld [vmem:[#allocation2 + $0x1d8] sm:$0xff]
    %v178 = vld [vmem:[#allocation2 + $0x1e0] sm:$0xff]
    %v179 = vld [vmem:[#allocation2 + $0x1e8] sm:$0xff]
    %v180 = vld [vmem:[#allocation2 + $0x1f0] sm:$0xff]
    %v181 = vld [vmem:[#allocation2 + $0x1f8] sm:$0xff]
    %v182 = vadd.f32 %v118, %v119
    %v183 = vadd.f32 %v182, %v120
    %v184 = vadd.f32 %v183, %v121
    %v185 = vadd.f32 %v184, %v122
    %v186 = vadd.f32 %v185, %v123
    %v187 = vadd.f32 %v186, %v124
    %v188 = vadd.f32 %v187, %v125
    %v189 = vadd.f32 %v188, %v126
    %v190 = vadd.f32 %v189, %v127
    %v191 = vadd.f32 %v190, %v128
    %v192 = vadd.f32 %v191, %v129
    %v193 = vadd.f32 %v192, %v130
    %v194 = vadd.f32 %v193, %v131
    %v195 = vadd.f32 %v194, %v132
    %v196 = vadd.f32 %v195, %v133
    %v197 = vadd.f32 %v196, %v134
    %v198 = vadd.f32 %v197, %v135
    %v199 = vadd.f32 %v198, %v136
    %v200 = vadd.f32 %v199, %v137
    %v201 = vadd.f32 %v200, %v138
    %v202 = vadd.f32 %v201, %v139
    %v203 = vadd.f32 %v202, %v140
    %v204 = vadd.f32 %v203, %v141
    %v205 = vadd.f32 %v204, %v142
    %v206 = vadd.f32 %v205, %v143
    %v207 = vadd.f32 %v206, %v144
    %v208 = vadd.f32 %v207, %v145
    %v209 = vadd.f32 %v208, %v146
    %v210 = vadd.f32 %v209, %v147
    %v211 = vadd.f32 %v210, %v148
    %v212 = vadd.f32 %v211, %v149
    %v213 = vadd.f32 %v212, %v150
    %v214 = vadd.f32 %v213, %v151
    %v215 = vadd.f32 %v214, %v152
    %v216 = vadd.f32 %v215, %v153
    %v217 = vadd.f32 %v216, %v154
    %v218 = vadd.f32 %v217, %v155
    %v219 = vadd.f32 %v218, %v156
    %v220 = vadd.f32 %v219, %v157
    %v221 = vadd.f32 %v220, %v158
    %v222 = vadd.f32 %v221, %v159
    %v223 = vadd.f32 %v222, %v160
    %v224 = vadd.f32 %v223, %v161
    %v225 = vadd.f32 %v224, %v162
    %v226 = vadd.f32 %v225, %v163
    %v227 = vadd.f32 %v226, %v164
    %v228 = vadd.f32 %v227, %v165
    %v229 = vadd.f32 %v228, %v166
    %v230 = vadd.f32 %v229, %v167
    %v231 = vadd.f32 %v230, %v168
    %v232 = vadd.f32 %v231, %v169
    %v233 = vadd.f32 %v232, %v170
    %v234 = vadd.f32 %v233, %v171
    %v235 = vadd.f32 %v234, %v172
    %v236 = vadd.f32 %v235, %v173
    %v237 = vadd.f32 %v236, %v174
    %v238 = vadd.f32 %v237, %v175
    %v239 = vadd.f32 %v238, %v176
    %v240 = vadd.f32 %v239, %v177
    %v241 = vadd.f32 %v240, %v178
    %v242 = vadd.f32 %v241, %v179
    %v243 = vadd.f32 %v242, %v180
    %v244 = vadd.f32 %v243, %v181
    %245 = vadd.xlane.f32.xlu0 %v244
    %v246 = vpop.xlane.xlu0 %245
    %v247 = vrot.slane %v246, 4
    %v248 = vadd.f32 %v246, %v247
    %v249 = vrot.slane %v248, 2
    %v250 = vadd.f32 %v248, %v249
    %v251 = vrot.slane %v250, 1
    %v252 = vadd.f32 %v250, %v251
    %s253 = vtos %v252
    %s254 = scalar_lea.smem [#allocation8], 0
    %255 = sst [smem:[%s254]] %s253
    // Predicated region
    $region18: #{tpu_custom_call.1} parent=1 // pred_check
      _
    $region19: #{tpu_custom_call.1} parent=1 // pred_check_branch
      %257 = sbr.rel (0) target = $region21
    $region20: #{tpu_custom_call.1} parent=1 // pred_region
      %s259 = ssub.s32 16, 16
      %260 = vsyncadd [#allocation5], %s259
      %263 = dma.smem_to_hbm [#allocation8], 16, %s2, [#allocation5]
    $region21: #{tpu_custom_call.1} parent=1 // pred_fallthru
      _
    // Predicated region
    $region22: #{tpu_custom_call.1} parent=1 // pred_check
      _
    $region23: #{tpu_custom_call.1} parent=1 // pred_check_branch
      %265 = sbr.rel (0) target = $region25
    $region24: #{tpu_custom_call.1} parent=1 // pred_region
      %266 = dma.done [#allocation5], 16
    $region25: #{tpu_custom_call.1} parent=1 // pred_fallthru
      _
    %267 = sfence
    %268 = vsyncpa [#allocation4], 1
    %269 = vsyncpa [#allocation7], 1
    %270 = vsyncpa [#allocation5], 1

</llo_original>
